<compile_context>
chip_gen: v7x
topology: tpu7x:2x2x1
jax: 0.10.0
libtpu: 0.0.40
codegen_flags: <defaults>
</compile_context>

<pallas_src>
import jax
import jax.numpy as jnp
from jax.experimental import pallas as pl
from jax.experimental.pallas import tpu as pltpu


def _make_label_smoothing_kernel(a: float, b: float):
    def kernel(x_ref, o_ref):
        x = x_ref[...]
        # Compute in f32 for precision, cast back to the output dtype.
        y = x.astype(jnp.float32) * jnp.float32(a) + jnp.float32(b)
        o_ref[...] = y.astype(o_ref.dtype)

    return kernel


def label_smoothing_pallas(x: jax.Array, eps: float = 0.1,
                           donate_input: bool = False) -> jax.Array:
    """y = (1 - eps) * x + eps / (x.shape[-1] - 1), elementwise, same shape/dtype.

    Set donate_input=True only when the caller also donates `x` (e.g. via
    jax.jit donate_argnums); it aliases the output onto the input buffer.
    """
    orig_shape = x.shape
    D = orig_shape[-1]
    assert D > 1, "last dimension must be > 1 (division by D - 1)"

    a = 1.0 - float(eps)
    b = float(eps) / float(D - 1)

    total = x.size
    itemsize = jnp.dtype(x.dtype).itemsize

    # ---- lane-dense 2-D layout (lane always a multiple of 128) ---------------
    lane = None
    for cand in (1024, 512, 256, 128):
        if total % cand == 0:
            lane = cand
            break
    xf = x.reshape(-1)
    pad = 0
    if lane is None:
        # Pad the flattened array to a 128-multiple lane width rather than
        # eating masked vst.msk partial stores on every row.
        lane = 512
        pad = (-total) % lane
        xf = jnp.pad(xf, (0, pad))
    rows = (total + pad) // lane
    x2 = xf.reshape(rows, lane)

    # ---- row tile selection ---------------------------------------------------
    # Sublane packing multiple: 8 for f32, 16 for bf16, 32 for int8/fp8.
    sub = max(8, 32 // itemsize)
    block_budget_bytes = 4 * 1024 * 1024  # ~4 MiB per block

    if rows <= sub:
        tm = rows  # full dim — always legal
    else:
        target_rows = max(sub, block_budget_bytes // (lane * itemsize))
        tm = min(rows, (target_rows // sub) * sub)
        tm = max(sub, tm)
        if tm >= rows:
            # Whole array would fit in one block: split anyway so v7x's two
            # TensorCores both get work (balanced halves, sublane-rounded).
            half = pl.cdiv(rows, 2)
            tm = ((half + sub - 1) // sub) * sub
            tm = min(tm, rows)

    grid = (pl.cdiv(rows, tm),)

    # Live working set: (in + out) x double-buffered = 4 x block.
    block_bytes = tm * lane * itemsize
    vmem_limit = min(48 * 1024 * 1024, 4 * block_bytes + 8 * 1024 * 1024)

    call_kwargs = {}
    if donate_input:
        call_kwargs["input_output_aliases"] = {0: 0}

    out2 = pl.pallas_call(
        _make_label_smoothing_kernel(a, b),
        out_shape=jax.ShapeDtypeStruct((rows, lane), x.dtype),
        grid_spec=pl.GridSpec(
            grid=grid,
            in_specs=[pl.BlockSpec((tm, lane), lambda i: (i, 0))],
            out_specs=pl.BlockSpec((tm, lane), lambda i: (i, 0)),
        ),
        compiler_params=pltpu.CompilerParams(
            dimension_semantics=("parallel",),
            vmem_limit_bytes=int(vmem_limit),
        ),
        cost_estimate=pl.CostEstimate(
            flops=2 * total,
            transcendentals=0,
            bytes_accessed=2 * total * itemsize,
        ),
        **call_kwargs,
    )(x2)

    out_flat = out2.reshape(-1)
    if pad:
        out_flat = out_flat[:total]
    return out_flat.reshape(orig_shape)


if __name__ == "__main__":
    # Small deterministic example consistent with label smoothing over class
    # probabilities: batch=2, seq=8, classes=32.
    key = jax.random.PRNGKey(0)
    B, S, C = 2, 8, 32
    eps = 0.1

    x = jax.random.uniform(key, (B, S, C), dtype=jnp.float32)

    out = label_smoothing_pallas(x, eps=eps)
    out = jax.block_until_ready(out)

    # Reference (exactly the PyTorch forward).
    ref = (1.0 - eps) * x + eps * jnp.ones_like(x) / (C - 1)

    assert out.shape == x.shape
    assert out.dtype == x.dtype
    assert jnp.allclose(out, ref, atol=1e-6), "Pallas LabelSmoothing does not match reference"

    # Also exercise a non-128-aligned total (padding path) for coverage.
    x2 = jax.random.uniform(jax.random.PRNGKey(1), (3, 5, 7), dtype=jnp.float32)
    out2 = jax.block_until_ready(label_smoothing_pallas(x2, eps=eps))
    ref2 = (1.0 - eps) * x2 + eps * jnp.ones_like(x2) / (7 - 1)
    assert jnp.allclose(out2, ref2, atol=1e-6), "padded path mismatch"

    print("KERNEL_OK")
</pallas_src>

<mosaic_0001>
module attributes {stable_mosaic.version = 11 : i64} {
  func.func @kernel(%arg0: i32, %arg1: memref<1x512xf32, #tpu.memory_space<vmem>>, %arg2: memref<1x512xf32, #tpu.memory_space<vmem>>) attributes {dimension_semantics = [#tpu.dimension_semantics<parallel>], iteration_bounds = array<i64: 1>, scalar_prefetch = 0 : i64, scratch_operands = 0 : i64, tpu.core_type = #tpu.core_type<tc>, window_params = [{transform_indices = @transform_0, window_bounds = array<i64: 1, 512>}, {transform_indices = @transform_1, window_bounds = array<i64: 1, 512>}]} {
    %c0 = arith.constant 0 : index
    %c0_0 = arith.constant 0 : index
    %0 = vector.load %arg1[%c0, %c0_0] : memref<1x512xf32, #tpu.memory_space<vmem>>, vector<1x512xf32>
    %cst = arith.constant 0.899999976 : f32
    %1 = vector.broadcast %cst : f32 to vector<1x512xf32>
    %2 = arith.mulf %0, %1 : vector<1x512xf32>
    %cst_1 = arith.constant 0.0032258064 : f32
    %3 = vector.broadcast %cst_1 : f32 to vector<1x512xf32>
    %4 = arith.addf %2, %3 : vector<1x512xf32>
    %c0_2 = arith.constant 0 : index
    %c0_3 = arith.constant 0 : index
    %5 = vector.load %arg2[%c0_2, %c0_3] : memref<1x512xf32, #tpu.memory_space<vmem>>, vector<1x512xf32>
    tpu.vector_store %arg2[%c0_2, %c0_3], %4 {strides = array<i32>} : memref<1x512xf32, #tpu.memory_space<vmem>>, vector<1x512xf32>,
    return
  }
  func.func @transform_0(%arg0: i32) -> (i32, i32) {
    %c0_i32 = arith.constant 0 : i32
    %c0_i32_0 = arith.constant 0 : i32
    return %arg0, %c0_i32 : i32, i32
  }
  func.func @transform_1(%arg0: i32) -> (i32, i32) {
    %c0_i32 = arith.constant 0 : i32
    %c0_i32_0 = arith.constant 0 : i32
    return %arg0, %c0_i32 : i32, i32
  }
}

</mosaic_0001>

<llo_original>
// kernel: tpu_custom_call.1
$region0: #{tpu_custom_call.1}
  #allocation0 [shape = 'u32[]', space=smem, size = 0x4, offset = 0x4, fixed_abs, tag = 'smem constant byte address 0x4 - core index']
  #allocation1 [shape = 'u32[144,128]{1,0:T(1,128)}', space=vmem, size = 0x12000, scoped, tag = 'internal scratch']
  %s0 = inlined_call_operand.hbm [shape: f32[1,512], index: 0, kind: input, shape index: {}]
  %s1 = inlined_call_operand.hbm [shape: f32[1,512], index: 1, kind: output, shape index: {}]
  %s2 = sld [smem:[#allocation0]]
  $region18: #{tpu_custom_call.1} parent=0
    _
  %s4 = ssub.s32 1, %s2
  %s5 = scalar_select 0, %s4, %s2
  $region1: #{tpu_custom_call.1} parent=0
    #allocation2 [shape = 'u8[2048]{0}', space=vmem, size = 0x800, scoped, tag = 'input window, operand 0, single buffered']
    #allocation3 [shape = 's32[1]{0}', space=sflag, size = 0x4, scoped, tag = 'scoped memory for tpu_custom_call.1']
    #allocation4 [shape = 's32[1]{0}', space=sflag, size = 0x4, scoped, tag = 'scoped memory for tpu_custom_call.1']
    #allocation5 [shape = 'u8[2048]{0}', space=vmem, size = 0x800, scoped, tag = 'output window, operand 0, single buffered']
    %6 = vsyncpa [#allocation3], 0
    %7 = vsyncpa [#allocation4], 0
    // Predicated region
    $region2: #{tpu_custom_call.1} parent=1 // pred_check
      _
    $region3: #{tpu_custom_call.1} parent=1 // pred_check_branch
      %9 = sbr.rel (0) target = $region5
    $region4: #{tpu_custom_call.1} parent=1 // pred_region
      %s11 = ssub.s32 64, 64
      %12 = vsyncadd [#allocation3], %s11
      %s14 = sshll.u32 [#allocation2], 4
      %s15 = int_to_ptr.vmem [resolvable:$true] %s14
      %17 = dma.hbm_to_vmem [thread:$0]  %s0, 64, %s15, [#allocation3]
    $region5: #{tpu_custom_call.1} parent=1 // pred_fallthru
      _
    // Predicated region
    $region6: #{tpu_custom_call.1} parent=1 // pred_check
      _
    $region7: #{tpu_custom_call.1} parent=1 // pred_check_branch
      %19 = sbr.rel (0) target = $region9
    $region8: #{tpu_custom_call.1} parent=1 // pred_region
      %20 = dma.done [#allocation3], 64
    $region9: #{tpu_custom_call.1} parent=1 // pred_fallthru
      _
    %v21 = vld [vmem:[#allocation2] sm:$0xf]
    %v22 = vmul.f32 %v21, 0.9
    %v23 = vadd.f32 %v22, 0.0032258064
    %v24 = vlaneseq
    %vm25 = vcmp.ge.s32.totalorder %v24, 0
    %vm26 = vcmp.lt.s32.totalorder %v24, 512
    %vm27 = vmand %vm25, %vm26
    %28 = vst.msk [vmem:[#allocation5] sm:$0xf] %vm27, %v23
    // Predicated region
    $region10: #{tpu_custom_call.1} parent=1 // pred_check
      _
    $region11: #{tpu_custom_call.1} parent=1 // pred_check_branch
      %30 = sbr.rel (0) target = $region13
    $region12: #{tpu_custom_call.1} parent=1 // pred_region
      %s32 = ssub.s32 64, 64
      %33 = vsyncadd [#allocation4], %s32
      %s35 = sshll.u32 [#allocation5], 4
      %s36 = int_to_ptr.vmem [resolvable:$true] %s35
      %38 = dma.vmem_to_hbm [thread:$0]  %s36, 64, %s1, [#allocation4]
    $region13: #{tpu_custom_call.1} parent=1 // pred_fallthru
      _
    // Predicated region
    $region14: #{tpu_custom_call.1} parent=1 // pred_check
      _
    $region15: #{tpu_custom_call.1} parent=1 // pred_check_branch
      %40 = sbr.rel (0) target = $region17
    $region16: #{tpu_custom_call.1} parent=1 // pred_region
      %41 = dma.done [#allocation4], 64
    $region17: #{tpu_custom_call.1} parent=1 // pred_fallthru
      _
    %42 = vsyncpa [#allocation3], 1
    %43 = vsyncpa [#allocation4], 1

</llo_original>
